<compile_context>
chip_gen: v7x
topology: tpu7x:2x2x1
jax: 0.10.0
libtpu: 0.0.40
codegen_flags: <defaults>
</compile_context>

<pallas_src>
import math
from functools import partial

import jax
import jax.numpy as jnp
from jax.experimental import pallas as pl
from jax.experimental.pallas import tpu as pltpu


def _round_up(x, m):
    return (x + m - 1) // m * m


# ----------------------------- Pallas kernel -----------------------------

def _embed_gather_kernel(ids_ref, table_ref, o_ref, row_buf, sem, *, scale):
    # ids_ref:   (n_pad,) int32  SMEM scalar-prefetch -- flat (clamped) token ids
    # table_ref: (V, D)          HBM (pl.ANY, no auto-DMA) -- embedding table
    # o_ref:     (tm, D)         VMEM output block
    # row_buf:   (tm, D)         VMEM scratch gather target
    # sem:                       shared DMA semaphore (all copies are same size)
    tm = o_ref.shape[0]
    base = pl.program_id(0) * tm

    # Issue all row gathers for this block; they run concurrently.
    @pl.loop(0, tm)
    def _issue(r):
        row = ids_ref[base + r]
        pltpu.make_async_copy(
            table_ref.at[pl.ds(row, 1), :],
            row_buf.at[pl.ds(r, 1), :],
            sem,
        ).start()

    # Wait for all of them (identical transfer sizes -> N starts / N waits).
    @pl.loop(0, tm)
    def _wait(r):
        pltpu.make_async_copy(
            table_ref.at[pl.ds(0, 1), :],
            row_buf.at[pl.ds(0, 1), :],
            sem,
        ).wait()

    # Fused sqrt(d_model) scaling, then store the whole block.
    o_ref[...] = (row_buf[...] * scale).astype(o_ref.dtype)


# ----------------------------- Wrapper -----------------------------

def embeddings_forward(table, x, d_model, *, row_block=256):
    """table: (vocab, d_model) embedding weights (padding row already zero).
       x:     (B, S) int32 token ids.
       Returns (B, S, d_model) = table[x] * sqrt(d_model)."""
    B, S = x.shape
    vocab, d = table.shape
    assert d == d_model

    n = B * S
    tm = min(_round_up(n, 8), row_block)      # rows gathered per grid step
    n_pad = _round_up(n, tm)

    # Flatten + pad ids; clamp so no id triggers an OOB DMA read.
    ids = jnp.zeros((n_pad,), jnp.int32).at[:n].set(x.reshape(n).astype(jnp.int32))
    ids = jnp.clip(ids, 0, vocab - 1)

    esize = jnp.dtype(table.dtype).itemsize
    vmem_limit = int(min(64 * 1024 * 1024,
                         max(16 * 1024 * 1024, 8 * tm * d * esize)))

    out = pl.pallas_call(
        partial(_embed_gather_kernel, scale=math.sqrt(d_model)),
        grid_spec=pltpu.PrefetchScalarGridSpec(
            num_scalar_prefetch=1,                       # ids -> SMEM
            grid=(n_pad // tm,),
            in_specs=[pl.BlockSpec(memory_space=pl.ANY)],  # table stays in HBM
            out_specs=pl.BlockSpec((tm, d), lambda i, ids_smem: (i, 0)),
            scratch_shapes=[pltpu.VMEM((tm, d), table.dtype),
                            pltpu.SemaphoreType.DMA],
        ),
        out_shape=jax.ShapeDtypeStruct((n_pad, d), table.dtype),
        compiler_params=pltpu.CompilerParams(
            dimension_semantics=("parallel",),            # megacore on v7x
            vmem_limit_bytes=vmem_limit),
    )(ids, table)

    return out[:n, :].reshape(B, S, d_model)


# ----------------------------- Main -----------------------------

if __name__ == "__main__":
    VOCAB, D_MODEL, PAD_IDX = 20, 32, 0
    B, S = 2, 8

    root = jax.random.PRNGKey(0)
    k_emb, k_tok = jax.random.split(root)

    # nn.Embedding default init ~ N(0, 1); padding_idx row zeroed (as PyTorch does).
    table = jax.random.normal(k_emb, (VOCAB, D_MODEL), jnp.float32)
    table = table.at[PAD_IDX].set(0.0)

    x = jax.random.randint(k_tok, (B, S), 1, VOCAB, dtype=jnp.int32)
    x = x.at[0, -2:].set(PAD_IDX)   # include some padding tokens

    out = embeddings_forward(table, x, D_MODEL)
    jax.block_until_ready(out)

    # Reference check against plain-JAX embedding lookup.
    ref = table[x] * math.sqrt(D_MODEL)
    assert out.shape == (B, S, D_MODEL)
    assert bool(jnp.all(jnp.isfinite(out)))
    assert bool(jnp.allclose(out, ref, atol=1e-5, rtol=1e-5))
    assert bool(jnp.all(out[0, -2:] == 0.0))   # padding tokens -> zero vectors
    print("KERNEL_OK")
</pallas_src>

<mosaic_0001>
module attributes {stable_mosaic.version = 11 : i64} {
  func.func @_embed_gather_kernel(%arg0: i32, %arg1: memref<16xi32, #tpu.memory_space<smem>>, %arg2: memref<20x32xf32, #tpu.memory_space<any>>, %arg3: memref<16x32xf32, #tpu.memory_space<vmem>>, %arg4: memref<16x32xf32, #tpu.memory_space<vmem>>, %arg5: memref<!tpu.dma_semaphore, #tpu.memory_space<semaphore_mem>>) attributes {dimension_semantics = [#tpu.dimension_semantics<parallel>], iteration_bounds = array<i64: 1>, scalar_prefetch = 1 : i64, scratch_operands = 2 : i64, tpu.core_type = #tpu.core_type<tc>, window_params = [{}, {transform_indices = @transform_1, window_bounds = array<i64: 16, 32>}]} {
    %c16_i32 = arith.constant 16 : i32
    %0 = arith.muli %arg0, %c16_i32 : i32
    %c0_i32 = arith.constant 0 : i32
    %c16_i32_0 = arith.constant 16 : i32
    %1 = arith.addi %c0_i32, %c16_i32_0 : i32
    %c1_i32 = arith.constant 1 : i32
    scf.for %arg6 = %c0_i32 to %1 step %c1_i32  : i32 {
      %c1_i32_8 = arith.constant 1 : i32
      %7 = arith.muli %arg6, %c1_i32_8 : i32
      %c0_i32_9 = arith.constant 0 : i32
      %8 = arith.addi %c0_i32_9, %7 : i32
      %9 = arith.addi %0, %8 : i32
      %10 = arith.index_cast %9 : i32 to index
      %11 = memref.load %arg1[%10] : memref<16xi32, #tpu.memory_space<smem>>
      %c0_i32_10 = arith.constant 0 : i32
      %12 = tpu.memref_slice %arg2[%11, %c0_i32_10] : memref<20x32xf32, #tpu.memory_space<any>> -> memref<1x32xf32, #tpu.memory_space<any>>
      %c0_i32_11 = arith.constant 0 : i32
      %13 = tpu.memref_slice %arg4[%8, %c0_i32_11] : memref<16x32xf32, #tpu.memory_space<vmem>> -> memref<1x32xf32, #tpu.memory_space<vmem>>
      tpu.enqueue_dma source(%12 : memref<1x32xf32, #tpu.memory_space<any>>) target(%13 : memref<1x32xf32, #tpu.memory_space<vmem>>) target_semaphore(%arg5 : memref<!tpu.dma_semaphore, #tpu.memory_space<semaphore_mem>>)
    }
    %c16_i32_1 = arith.constant 16 : i32
    %c0_i32_2 = arith.constant 0 : i32
    %c16_i32_3 = arith.constant 16 : i32
    %2 = arith.addi %c0_i32_2, %c16_i32_3 : i32
    %c1_i32_4 = arith.constant 1 : i32
    scf.for %arg6 = %c0_i32_2 to %2 step %c1_i32_4  : i32 {
      %c0_i32_8 = arith.constant 0 : i32
      %c0_i32_9 = arith.constant 0 : i32
      %7 = tpu.memref_slice %arg2[%c0_i32_8, %c0_i32_9] : memref<20x32xf32, #tpu.memory_space<any>> -> memref<1x32xf32, #tpu.memory_space<any>>
      %c0_i32_10 = arith.constant 0 : i32
      %c0_i32_11 = arith.constant 0 : i32
      %8 = tpu.memref_slice %arg4[%c0_i32_10, %c0_i32_11] : memref<16x32xf32, #tpu.memory_space<vmem>> -> memref<1x32xf32, #tpu.memory_space<vmem>>
      tpu.wait_dma2 semaphore(%arg5 : memref<!tpu.dma_semaphore, #tpu.memory_space<semaphore_mem>>) src(%7 : memref<1x32xf32, #tpu.memory_space<any>>) dst(%8 : memref<1x32xf32, #tpu.memory_space<vmem>>)
    }
    %c0 = arith.constant 0 : index
    %c0_5 = arith.constant 0 : index
    %3 = vector.load %arg4[%c0, %c0_5] : memref<16x32xf32, #tpu.memory_space<vmem>>, vector<16x32xf32>
    %cst = arith.constant 5.65685415 : f32
    %4 = vector.broadcast %cst : f32 to vector<16x32xf32>
    %5 = arith.mulf %3, %4 : vector<16x32xf32>
    %c0_6 = arith.constant 0 : index
    %c0_7 = arith.constant 0 : index
    %6 = vector.load %arg3[%c0_6, %c0_7] : memref<16x32xf32, #tpu.memory_space<vmem>>, vector<16x32xf32>
    tpu.vector_store %arg3[%c0_6, %c0_7], %5 {strides = array<i32>} : memref<16x32xf32, #tpu.memory_space<vmem>>, vector<16x32xf32>,
    return
  }
  func.func @transform_1(%arg0: i32, %arg1: memref<16xi32, #tpu.memory_space<smem>>) -> (i32, i32) {
    %c0_i32 = arith.constant 0 : i32
    %c0_i32_0 = arith.constant 0 : i32
    return %arg0, %c0_i32 : i32, i32
  }
}

</mosaic_0001>

<llo_original>
// kernel: tpu_custom_call.1
$region0: #{tpu_custom_call.1}
  #allocation0 [shape = 'u32[]', space=smem, size = 0x4, offset = 0x4, fixed_abs, tag = 'smem constant byte address 0x4 - core index']
  #allocation1 [shape = 'u32[144,128]{1,0:T(1,128)}', space=vmem, size = 0x12000, scoped, tag = 'internal scratch']
  #allocation2 [shape = 'f32[16,32]{1,0:T(8,128)}', space=vmem, size = 0x2000, scoped, tag = 'scratch operand']
  #allocation3 [shape = 's32[1]{0}', space=sflag, size = 0x4, scoped, tag = 'scratch operand']
  #allocation4 [shape = 's32[1]{0}', space=sflag, size = 0x4, scoped, tag = 'scoped memory for tpu_custom_call.1']
  #allocation5 [shape = 'u8[512]{0}', space=smem, size = 0x200, scoped, tag = 'prefetched SMEM operand 0']
  #allocation8 [shape = 's32[]', space=sflag, size = 0x4, offset = 0, fixed_abs, tag = 'sflag constant byte address 0x0 - dummy sync flag']
  #allocation9 [shape = 's32[]', space=sflag, size = 0x4, offset = 0, fixed_abs, tag = 'sflag constant byte address 0x0 - dummy sync flag']
  #allocation10 [shape = 'u32[]', space=smem, size = 0x4, offset = 0x44, fixed_abs, tag = 'smem constant byte address 0x44 - assertion arg 0']
  #allocation11 [shape = 'u32[]', space=smem, size = 0x4, offset = 0x48, fixed_abs, tag = 'smem constant byte address 0x48 - assertion arg 1']
  %s0 = inlined_call_operand.hbm [shape: s32[16], index: 0, kind: input, shape index: {}]
  %s1 = inlined_call_operand.hbm [shape: f32[20,32], index: 1, kind: input, shape index: {}]
  %s2 = inlined_call_operand.hbm [shape: f32[16,32], index: 2, kind: output, shape index: {}]
  %s3 = sld [smem:[#allocation0]]
  $region28: #{tpu_custom_call.1} parent=0
    _
  %s5 = ssub.s32 1, %s3
  %s6 = scalar_select 0, %s5, %s3
  %8 = dma.hbm_to_smem %s0, 16, [#allocation5], [#allocation4]
  %9 = dma.done [#allocation4], 16
  %10 = sfence
  $region1: #{tpu_custom_call.1} parent=0
    #allocation6 [shape = 'u8[8192]{0}', space=vmem, size = 0x2000, scoped, tag = 'output window, operand 0, single buffered']
    #allocation7 [shape = 's32[1]{0}', space=sflag, size = 0x4, scoped, tag = 'scoped memory for tpu_custom_call.1']
    %11 = vsyncpa [#allocation7], 0
    %s12 = smul.u32 0, 16
    loop: start=0, step=1, limit=16
    $region2: #{tpu_custom_call.1} parent=1 // loop_pre_header
      _
    $region3: #{tpu_custom_call.1} parent=1 // loop_header
      %s14 = sphi 0, %s18
      %p15 = scmp.ge.s32.totalorder %s14, 16
    $region4: #{tpu_custom_call.1} parent=1 // loop_header_branch
      %17 = sbr.rel (%p15) target = $region8
    $region5: #{tpu_custom_call.1} parent=1 // loop_body
      %s19 = sadd.s32 %s12, %s14
      %s20 = sld [smem:[#allocation5 + %s19]]
      %s21 = smul.addr %s20, 16
      %s22 = scalar_lea.hbm %s1, %s21
      %s23 = scalar_lea.vmem [#allocation2], %s14
      // Predicated region
      $region9: #{tpu_custom_call.1} parent=5 // pred_check
        _
      $region10: #{tpu_custom_call.1} parent=5 // pred_check_branch
        %25 = sbr.rel target = $region12
      $region11: #{tpu_custom_call.1} parent=5 // pred_region
        %26 = sst [smem:[#allocation10]] [#allocation9]
        %27 = sst [smem:[#allocation11]] [#allocation8]
      $region12: #{tpu_custom_call.1} parent=5 // pred_fallthru
        _
      %29 = shalt.err (0)
      %s31 = sshll.u32 %s23, 4
      %s32 = int_to_ptr.vmem [resolvable:$true] %s31
      %34 = dma.hbm_to_vmem [thread:$0]  %s22, 16, %s32, [#allocation3]
    $region6: #{tpu_custom_call.1} parent=1 // loop_footer
      %s18 = sadd.s32 1, %s14
    $region7: #{tpu_custom_call.1} parent=1 // loop_footer_branch
      %13 = sbr.rel target = $region3
    $region8: #{tpu_custom_call.1} parent=1 // loop_exit
      _
    loop: start=0, step=1, limit=16
    $region13: #{tpu_custom_call.1} parent=1 // loop_pre_header
      _
    $region14: #{tpu_custom_call.1} parent=1 // loop_header
      %s36 = sphi 0, %s40
      %p37 = scmp.ge.s32.totalorder %s36, 16
    $region15: #{tpu_custom_call.1} parent=1 // loop_header_branch
      %39 = sbr.rel (%p37) target = $region19
    $region16: #{tpu_custom_call.1} parent=1 // loop_body
      %s41 = smul.u32 1, 1
      %s42 = sshll.u32 %s41, 4
      %43 = dma.done [#allocation3], %s42
    $region17: #{tpu_custom_call.1} parent=1 // loop_footer
      %s40 = sadd.s32 1, %s36
    $region18: #{tpu_custom_call.1} parent=1 // loop_footer_branch
      %35 = sbr.rel target = $region14
    $region19: #{tpu_custom_call.1} parent=1 // loop_exit
      _
    %v44 = vld [vmem:[#allocation2] sm:$0xff]
    %v45 = vld [vmem:[#allocation2 + $0x8] sm:$0xff]
    %v46 = vmul.f32 %v44, 5.656854
    %v47 = vmul.f32 %v45, 5.656854
    %vm48 = vcmask 261120
    %49 = vst.msk [vmem:[#allocation6] sm:$0xff] %vm48, %v46
    %50 = vst.msk [vmem:[#allocation6 + $0x8] sm:$0xff] %vm48, %v47
    // Predicated region
    $region20: #{tpu_custom_call.1} parent=1 // pred_check
      _
    $region21: #{tpu_custom_call.1} parent=1 // pred_check_branch
      %52 = sbr.rel (0) target = $region23
    $region22: #{tpu_custom_call.1} parent=1 // pred_region
      %s54 = ssub.s32 256, 256
      %55 = vsyncadd [#allocation7], %s54
      %s56 = sshll.u32 [#allocation6], 4
      %s57 = int_to_ptr.vmem [resolvable:$true] %s56
      %62 = dma.vmem_to_hbm [thread:$0]  %s57, 256, %s2, [#allocation7], 128, 128, 8
    $region23: #{tpu_custom_call.1} parent=1 // pred_fallthru
      _
    // Predicated region
    $region24: #{tpu_custom_call.1} parent=1 // pred_check
      _
    $region25: #{tpu_custom_call.1} parent=1 // pred_check_branch
      %64 = sbr.rel (0) target = $region27
    $region26: #{tpu_custom_call.1} parent=1 // pred_region
      %65 = dma.done [#allocation7], 256
    $region27: #{tpu_custom_call.1} parent=1 // pred_fallthru
      _
    %66 = vsyncpa [#allocation7], 1
  %67 = vsyncmov [#allocation3]
  %s68 = vpop.sfrf %67
  %p69 = scmp.eq.s32.totalorder %s68, 0
  %p70 = pneg %p69
  %72 = shalt.err (%p70)

</llo_original>
